<compile_context>
chip_gen: v6e
topology: v6e:2x2x1
jax: 0.10.0
libtpu: 0.0.40
codegen_flags: <defaults>
</compile_context>

<pallas_src>
import functools

import jax
import jax.numpy as jnp
from jax import lax
from jax.experimental import pallas as pl
from jax.experimental.pallas import tpu as pltpu


def _residual_kernel(x_ref, mask_ref,
                     bn_s_ref, bn_b_ref,
                     w1_ref, b1_ref,
                     w2_ref, b2_ref,
                     wout_ref, bout_ref,
                     o_ref,
                     *, width, block_n, identity_skip):
    # x_ref block: (block_n, Cin, H*W); o_ref block: (block_n, Cout, H*W)
    hw = x_ref.shape[-1]

    # Hoist all (tiny) weight loads out of the per-image loop.
    bn_s = bn_s_ref[...]
    bn_b = bn_b_ref[...]
    w1 = w1_ref[...]
    b1 = b1_ref[...]
    w2 = w2_ref[...]
    b2 = b2_ref[...]
    wout = wout_ref[...]
    bout = bout_ref[...]

    for b in range(block_n):                     # static unroll over the block
        xf = x_ref[b].astype(jnp.float32)        # (Cin, HW), lane-dense

        # bn + relu (eval-mode BN as per-channel affine)
        h = jnp.maximum(xf * bn_s + bn_b, 0.0)

        # conv1 (1x1) with bn1 folded in, + relu
        h = jnp.dot(w1, h, preferred_element_type=jnp.float32) + b1
        h = jnp.maximum(h, 0.0)                  # (Cmid, HW)

        # conv2 (3x3, stride 1, pad 1) with bn2 folded in:
        # build the im2col tile with 9 lane rolls + boundary masks,
        # then contract it in a single matmul.
        taps = []
        for t in range(9):
            dy, dx = t // 3 - 1, t % 3 - 1
            if dy == 0 and dx == 0:
                taps.append(h)                   # center tap: no shift, no mask
            else:
                shift = (-(dy * width + dx)) % hw
                taps.append(pltpu.roll(h, shift, axis=1) * mask_ref[t:t + 1, :])
        tap_mat = jnp.concatenate(taps, axis=0)  # (9*Cmid, HW)
        h2 = jnp.dot(w2, tap_mat, preferred_element_type=jnp.float32) + b2
        h2 = jnp.maximum(h2, 0.0)                # (Cmid, HW)

        # conv3 (1x1) + skip.
        if identity_skip:
            # numIn == numOut: identity skip -> plain add of the raw input.
            out = jnp.dot(wout, h2, preferred_element_type=jnp.float32) + bout + xf
        else:
            # conv4 projection fused into the same matmul (K = Cmid + Cin).
            cat = jnp.concatenate([h2, xf], axis=0)
            out = jnp.dot(wout, cat, preferred_element_type=jnp.float32) + bout

        o_ref[b] = out.astype(o_ref.dtype)


def residual_pallas(x_nchw, params, *, block_n=None):
    (bn_s, bn_b, w1, b1, bn1_s, bn1_b,
     w2_hwio, b2, bn2_s, bn2_b, w3, b3, w4, b4) = params

    N, Cin, H, W = x_nchw.shape
    Cmid = w1.shape[1]
    Cout = w3.shape[1]
    HW = H * W
    identity_skip = w4 is None
    f32 = jnp.float32

    # NCHW -> (N, C, H*W): pure reshape, already the layout the kernel wants.
    x = x_nchw.reshape(N, Cin, HW)

    # ---- host-side (trace-time) parameter preparation -----------------------
    bn_s_c = bn_s.reshape(Cin, 1).astype(f32)
    bn_b_c = bn_b.reshape(Cin, 1).astype(f32)

    # Fold bn1 into conv1:  relu(bn1(conv1(.))) == relu(W1f @ . + b1f)
    w1f = (w1 * bn1_s.reshape(1, Cmid)).T.astype(f32)                   # (Cmid, Cin)
    b1f = (b1.reshape(Cmid) * bn1_s.reshape(Cmid)
           + bn1_b.reshape(Cmid)).reshape(Cmid, 1).astype(f32)

    # Fold bn2 into conv2 and lay the 3x3 weights out for one im2col matmul:
    #   W2mat[co, t*Cmid + ci] = w2[ky, kx, ci, co] * bn2_scale[co],  t = ky*3+kx
    w2f = (w2_hwio * bn2_s.reshape(1, 1, 1, Cmid)).astype(f32)
    w2mat = w2f.reshape(9, Cmid, Cmid).transpose(2, 0, 1).reshape(Cmid, 9 * Cmid)
    b2f = (b2.reshape(Cmid) * bn2_s.reshape(Cmid)
           + bn2_b.reshape(Cmid)).reshape(Cmid, 1).astype(f32)

    # conv3 (+ fused conv4 projection of the raw input when numIn != numOut).
    if identity_skip:
        wout = jnp.transpose(w3).astype(f32)                            # (Cout, Cmid)
        bout = b3.reshape(Cout, 1).astype(f32)
    else:
        wout = jnp.concatenate([jnp.transpose(w3), jnp.transpose(w4)],
                               axis=1).astype(f32)                      # (Cout, Cmid+Cin)
        bout = (b3.reshape(Cout) + b4.reshape(Cout)).reshape(Cout, 1).astype(f32)

    # Boundary masks for the 9 taps of the 3x3 conv (H*W on the lane axis).
    yy, xx = jnp.meshgrid(jnp.arange(H), jnp.arange(W), indexing="ij")
    mask_rows = []
    for t in range(9):
        dy, dx = t // 3 - 1, t % 3 - 1
        valid = ((yy + dy >= 0) & (yy + dy < H) &
                 (xx + dx >= 0) & (xx + dx < W))
        mask_rows.append(valid.reshape(1, HW))
    mask9 = jnp.concatenate(mask_rows, axis=0).astype(f32)              # (9, HW)

    # ---- grid / block selection ---------------------------------------------
    if block_n is None:
        # Amortize per-step pipeline overhead, but keep >= 2 grid steps so both
        # v7x TensorCores get work (v5e / v6e have a single TC).
        block_n = max(1, N // 2)
    while N % block_n:
        block_n -= 1
    grid_n = N // block_n

    def const_spec(arr):
        rank = arr.ndim
        return pl.BlockSpec(arr.shape, lambda n, _r=rank: (0,) * _r)

    kernel = functools.partial(_residual_kernel, width=W,
                               block_n=block_n, identity_skip=identity_skip)

    out = pl.pallas_call(
        kernel,
        out_shape=jax.ShapeDtypeStruct((N, Cout, HW), f32),
        grid_spec=pltpu.PrefetchScalarGridSpec(
            num_scalar_prefetch=0,
            grid=(grid_n,),
            in_specs=[
                pl.BlockSpec((block_n, Cin, HW), lambda n: (n, 0, 0)),
                const_spec(mask9),
                const_spec(bn_s_c), const_spec(bn_b_c),
                const_spec(w1f), const_spec(b1f),
                const_spec(w2mat), const_spec(b2f),
                const_spec(wout), const_spec(bout),
            ],
            out_specs=pl.BlockSpec((block_n, Cout, HW), lambda n: (n, 0, 0)),
        ),
        compiler_params=pltpu.CompilerParams(
            dimension_semantics=("parallel",)),
    )(x, mask9, bn_s_c, bn_b_c, w1f, b1f, w2mat, b2f, wout, bout)

    return out.reshape(N, Cout, H, W)


def residual_ref(x_nchw, params):
    """Pure-JAX reference (eval-mode BN), for correctness checking."""
    (bn_s, bn_b, w1, b1, bn1_s, bn1_b,
     w2_hwio, b2, bn2_s, bn2_b, w3, b3, w4, b4) = params
    x = jnp.transpose(x_nchw, (0, 2, 3, 1))
    h = jnp.maximum(x * bn_s + bn_b, 0.0)
    h = jnp.einsum('nhwc,cd->nhwd', h, w1) + b1
    h = jnp.maximum(h * bn1_s + bn1_b, 0.0)
    h = lax.conv_general_dilated(
        h, w2_hwio, window_strides=(1, 1), padding='SAME',
        dimension_numbers=('NHWC', 'HWIO', 'NHWC')) + b2
    h = jnp.maximum(h * bn2_s + bn2_b, 0.0)
    out = jnp.einsum('nhwc,cd->nhwd', h, w3) + b3
    if w4 is None:
        res = x
    else:
        res = jnp.einsum('nhwc,cd->nhwd', x, w4) + b4
    return jnp.transpose(out + res, (0, 3, 1, 2))


def make_params(key, numIn, numOut, eps=1e-5):
    Cmid = numOut // 2
    keys = jax.random.split(key, 20)

    def u(k, shape, lo=-1.0, hi=1.0):
        return jax.random.uniform(k, shape, jnp.float32, lo, hi)

    def bn_fold(k0, k1, k2, k3, C):
        gamma = u(k0, (C,), 0.5, 1.5)
        beta = u(k1, (C,), -0.5, 0.5)
        mean = u(k2, (C,), -0.5, 0.5)
        var = u(k3, (C,), 0.5, 1.5)
        scale = gamma / jnp.sqrt(var + eps)
        bias = beta - mean * scale
        return scale.reshape(1, C), bias.reshape(1, C)

    bn_s, bn_b = bn_fold(keys[0], keys[1], keys[2], keys[3], numIn)
    bn1_s, bn1_b = bn_fold(keys[4], keys[5], keys[6], keys[7], Cmid)
    bn2_s, bn2_b = bn_fold(keys[8], keys[9], keys[10], keys[11], Cmid)

    w1 = u(keys[12], (numIn, Cmid)) * 0.5          # conv1 (1x1): Cin -> Cmid
    b1 = u(keys[13], (1, Cmid)) * 0.1
    w2 = u(keys[14], (3, 3, Cmid, Cmid)) * 0.3     # conv2 (3x3), HWIO layout
    b2 = u(keys[15], (1, Cmid)) * 0.1
    w3 = u(keys[16], (Cmid, numOut)) * 0.5         # conv3 (1x1): Cmid -> Cout
    b3 = u(keys[17], (1, numOut)) * 0.1
    if numIn != numOut:
        w4 = u(keys[18], (numIn, numOut)) * 0.5    # conv4 (1x1): skip projection
        b4 = u(keys[19], (1, numOut)) * 0.1
    else:
        w4, b4 = None, None                        # identity skip
    return (bn_s, bn_b, w1, b1, bn1_s, bn1_b,
            w2, b2, bn2_s, bn2_b, w3, b3, w4, b4)


if __name__ == "__main__":
    key = jax.random.PRNGKey(0)
    k_x1, k_p1, k_x2, k_p2 = jax.random.split(key, 4)

    # Case 1: numIn != numOut (projection skip; conv4 fused into epilogue matmul).
    N, numIn, numOut, H, W = 2, 4, 8, 16, 16
    x1 = jax.random.normal(k_x1, (N, numIn, H, W), jnp.float32)
    p1 = make_params(k_p1, numIn, numOut)
    out1 = jax.block_until_ready(jax.jit(residual_pallas)(x1, p1))
    ref1 = residual_ref(x1, p1)
    assert out1.shape == (N, numOut, H, W), out1.shape
    assert jnp.allclose(out1, ref1, atol=1e-4, rtol=1e-4), \
        float(jnp.max(jnp.abs(out1 - ref1)))

    # Case 2: numIn == numOut (identity skip; no identity matmul is issued).
    numIn2 = numOut2 = 8
    x2 = jax.random.normal(k_x2, (N, numIn2, H, W), jnp.float32)
    p2 = make_params(k_p2, numIn2, numOut2)
    out2 = jax.block_until_ready(jax.jit(residual_pallas)(x2, p2))
    ref2 = residual_ref(x2, p2)
    assert out2.shape == (N, numOut2, H, W), out2.shape
    assert jnp.allclose(out2, ref2, atol=1e-4, rtol=1e-4), \
        float(jnp.max(jnp.abs(out2 - ref2)))

    print("KERNEL_OK")
</pallas_src>

<mosaic_0001>
module attributes {stable_mosaic.version = 11 : i64} {
  func.func @_residual_kernel(%arg0: i32, %arg1: memref<1x4x256xf32, #tpu.memory_space<vmem>>, %arg2: memref<9x256xf32, #tpu.memory_space<vmem>>, %arg3: memref<4x1xf32, #tpu.memory_space<vmem>>, %arg4: memref<4x1xf32, #tpu.memory_space<vmem>>, %arg5: memref<4x4xf32, #tpu.memory_space<vmem>>, %arg6: memref<4x1xf32, #tpu.memory_space<vmem>>, %arg7: memref<4x36xf32, #tpu.memory_space<vmem>>, %arg8: memref<4x1xf32, #tpu.memory_space<vmem>>, %arg9: memref<8x8xf32, #tpu.memory_space<vmem>>, %arg10: memref<8x1xf32, #tpu.memory_space<vmem>>, %arg11: memref<1x8x256xf32, #tpu.memory_space<vmem>>) attributes {dimension_semantics = [#tpu.dimension_semantics<parallel>], iteration_bounds = array<i64: 2>, scalar_prefetch = 0 : i64, scratch_operands = 0 : i64, tpu.core_type = #tpu.core_type<tc>, window_params = [{transform_indices = @transform_0, window_bounds = array<i64: 1, 4, 256>}, {pipeline_mode = #tpu.pipeline_mode<synchronous>, transform_indices = @transform_1, window_bounds = array<i64: 9, 256>}, {pipeline_mode = #tpu.pipeline_mode<synchronous>, transform_indices = @transform_2, window_bounds = array<i64: 4, 1>}, {pipeline_mode = #tpu.pipeline_mode<synchronous>, transform_indices = @transform_3, window_bounds = array<i64: 4, 1>}, {pipeline_mode = #tpu.pipeline_mode<synchronous>, transform_indices = @transform_4, window_bounds = array<i64: 4, 4>}, {pipeline_mode = #tpu.pipeline_mode<synchronous>, transform_indices = @transform_5, window_bounds = array<i64: 4, 1>}, {pipeline_mode = #tpu.pipeline_mode<synchronous>, transform_indices = @transform_6, window_bounds = array<i64: 4, 36>}, {pipeline_mode = #tpu.pipeline_mode<synchronous>, transform_indices = @transform_7, window_bounds = array<i64: 4, 1>}, {pipeline_mode = #tpu.pipeline_mode<synchronous>, transform_indices = @transform_8, window_bounds = array<i64: 8, 8>}, {pipeline_mode = #tpu.pipeline_mode<synchronous>, transform_indices = @transform_9, window_bounds = array<i64: 8, 1>}, {transform_indices = @transform_10, window_bounds = array<i64: 1, 8, 256>}]} {
    %c0 = arith.constant 0 : index
    %c0_0 = arith.constant 0 : index
    %0 = vector.load %arg3[%c0, %c0_0] : memref<4x1xf32, #tpu.memory_space<vmem>>, vector<4x1xf32>
    %c0_1 = arith.constant 0 : index
    %c0_2 = arith.constant 0 : index
    %1 = vector.load %arg4[%c0_1, %c0_2] : memref<4x1xf32, #tpu.memory_space<vmem>>, vector<4x1xf32>
    %c0_3 = arith.constant 0 : index
    %c0_4 = arith.constant 0 : index
    %2 = vector.load %arg5[%c0_3, %c0_4] : memref<4x4xf32, #tpu.memory_space<vmem>>, vector<4x4xf32>
    %c0_5 = arith.constant 0 : index
    %c0_6 = arith.constant 0 : index
    %3 = vector.load %arg6[%c0_5, %c0_6] : memref<4x1xf32, #tpu.memory_space<vmem>>, vector<4x1xf32>
    %c0_7 = arith.constant 0 : index
    %c0_8 = arith.constant 0 : index
    %4 = vector.load %arg7[%c0_7, %c0_8] : memref<4x36xf32, #tpu.memory_space<vmem>>, vector<4x36xf32>
    %c0_9 = arith.constant 0 : index
    %c0_10 = arith.constant 0 : index
    %5 = vector.load %arg8[%c0_9, %c0_10] : memref<4x1xf32, #tpu.memory_space<vmem>>, vector<4x1xf32>
    %c0_11 = arith.constant 0 : index
    %c0_12 = arith.constant 0 : index
    %6 = vector.load %arg9[%c0_11, %c0_12] : memref<8x8xf32, #tpu.memory_space<vmem>>, vector<8x8xf32>
    %c0_13 = arith.constant 0 : index
    %c0_14 = arith.constant 0 : index
    %7 = vector.load %arg10[%c0_13, %c0_14] : memref<8x1xf32, #tpu.memory_space<vmem>>, vector<8x1xf32>
    %c0_15 = arith.constant 0 : index
    %c0_16 = arith.constant 0 : index
    %c0_17 = arith.constant 0 : index
    %8 = vector.load %arg1[%c0_15, %c0_16, %c0_17] : memref<1x4x256xf32, #tpu.memory_space<vmem>>, vector<1x4x256xf32>
    %9 = vector.shape_cast %8 : vector<1x4x256xf32> to vector<4x256xf32>
    %10 = vector.broadcast %0 : vector<4x1xf32> to vector<4x256xf32>
    %11 = arith.mulf %9, %10 : vector<4x256xf32>
    %12 = vector.broadcast %1 : vector<4x1xf32> to vector<4x256xf32>
    %13 = arith.addf %11, %12 : vector<4x256xf32>
    %cst = arith.constant 0.000000e+00 : f32
    %14 = vector.broadcast %cst : f32 to vector<4x256xf32>
    %15 = arith.maximumf %13, %14 : vector<4x256xf32>
    %cst_18 = arith.constant dense<0.000000e+00> : vector<4x256xf32>
    %16 = tpu.matmul %2, %15, %cst_18 {dimension_numbers = #tpu.dot_dimension_numbers<[1], [0], [0], [1], [0, 0, 1, 1], [], []>} : vector<4x4xf32>, vector<4x256xf32>, vector<4x256xf32> -> vector<4x256xf32>
    %17 = vector.broadcast %3 : vector<4x1xf32> to vector<4x256xf32>
    %18 = arith.addf %16, %17 : vector<4x256xf32>
    %cst_19 = arith.constant 0.000000e+00 : f32
    %19 = vector.broadcast %cst_19 : f32 to vector<4x256xf32>
    %20 = arith.maximumf %18, %19 : vector<4x256xf32>
    %c17_i32 = arith.constant 17 : i32
    %21 = tpu.dynamic_rotate %20 by %c17_i32 dim 1 : vector<4x256xf32>, i32 -> vector<4x256xf32>
    %c0_20 = arith.constant 0 : index
    %c0_21 = arith.constant 0 : index
    %22 = vector.load %arg2[%c0_20, %c0_21] : memref<9x256xf32, #tpu.memory_space<vmem>>, vector<1x256xf32>
    %23 = vector.broadcast %22 : vector<1x256xf32> to vector<4x256xf32>
    %24 = arith.mulf %21, %23 : vector<4x256xf32>
    %c16_i32 = arith.constant 16 : i32
    %25 = tpu.dynamic_rotate %20 by %c16_i32 dim 1 : vector<4x256xf32>, i32 -> vector<4x256xf32>
    %c1 = arith.constant 1 : index
    %c0_22 = arith.constant 0 : index
    %26 = vector.load %arg2[%c1, %c0_22] : memref<9x256xf32, #tpu.memory_space<vmem>>, vector<1x256xf32>
    %27 = vector.broadcast %26 : vector<1x256xf32> to vector<4x256xf32>
    %28 = arith.mulf %25, %27 : vector<4x256xf32>
    %c15_i32 = arith.constant 15 : i32
    %29 = tpu.dynamic_rotate %20 by %c15_i32 dim 1 : vector<4x256xf32>, i32 -> vector<4x256xf32>
    %c2 = arith.constant 2 : index
    %c0_23 = arith.constant 0 : index
    %30 = vector.load %arg2[%c2, %c0_23] : memref<9x256xf32, #tpu.memory_space<vmem>>, vector<1x256xf32>
    %31 = vector.broadcast %30 : vector<1x256xf32> to vector<4x256xf32>
    %32 = arith.mulf %29, %31 : vector<4x256xf32>
    %c1_i32 = arith.constant 1 : i32
    %33 = tpu.dynamic_rotate %20 by %c1_i32 dim 1 : vector<4x256xf32>, i32 -> vector<4x256xf32>
    %c3 = arith.constant 3 : index
    %c0_24 = arith.constant 0 : index
    %34 = vector.load %arg2[%c3, %c0_24] : memref<9x256xf32, #tpu.memory_space<vmem>>, vector<1x256xf32>
    %35 = vector.broadcast %34 : vector<1x256xf32> to vector<4x256xf32>
    %36 = arith.mulf %33, %35 : vector<4x256xf32>
    %c255_i32 = arith.constant 255 : i32
    %37 = tpu.dynamic_rotate %20 by %c255_i32 dim 1 : vector<4x256xf32>, i32 -> vector<4x256xf32>
    %c5 = arith.constant 5 : index
    %c0_25 = arith.constant 0 : index
    %38 = vector.load %arg2[%c5, %c0_25] : memref<9x256xf32, #tpu.memory_space<vmem>>, vector<1x256xf32>
    %39 = vector.broadcast %38 : vector<1x256xf32> to vector<4x256xf32>
    %40 = arith.mulf %37, %39 : vector<4x256xf32>
    %c241_i32 = arith.constant 241 : i32
    %41 = tpu.dynamic_rotate %20 by %c241_i32 dim 1 : vector<4x256xf32>, i32 -> vector<4x256xf32>
    %c6 = arith.constant 6 : index
    %c0_26 = arith.constant 0 : index
    %42 = vector.load %arg2[%c6, %c0_26] : memref<9x256xf32, #tpu.memory_space<vmem>>, vector<1x256xf32>
    %43 = vector.broadcast %42 : vector<1x256xf32> to vector<4x256xf32>
    %44 = arith.mulf %41, %43 : vector<4x256xf32>
    %c240_i32 = arith.constant 240 : i32
    %45 = tpu.dynamic_rotate %20 by %c240_i32 dim 1 : vector<4x256xf32>, i32 -> vector<4x256xf32>
    %c7 = arith.constant 7 : index
    %c0_27 = arith.constant 0 : index
    %46 = vector.load %arg2[%c7, %c0_27] : memref<9x256xf32, #tpu.memory_space<vmem>>, vector<1x256xf32>
    %47 = vector.broadcast %46 : vector<1x256xf32> to vector<4x256xf32>
    %48 = arith.mulf %45, %47 : vector<4x256xf32>
    %c239_i32 = arith.constant 239 : i32
    %49 = tpu.dynamic_rotate %20 by %c239_i32 dim 1 : vector<4x256xf32>, i32 -> vector<4x256xf32>
    %c8 = arith.constant 8 : index
    %c0_28 = arith.constant 0 : index
    %50 = vector.load %arg2[%c8, %c0_28] : memref<9x256xf32, #tpu.memory_space<vmem>>, vector<1x256xf32>
    %51 = vector.broadcast %50 : vector<1x256xf32> to vector<4x256xf32>
    %52 = arith.mulf %49, %51 : vector<4x256xf32>
    %53 = tpu.concatenate %24, %28, %32, %36, %20, %40, %44, %48, %52 in 0 : vector<4x256xf32>, vector<4x256xf32>, vector<4x256xf32>, vector<4x256xf32>, vector<4x256xf32>, vector<4x256xf32>, vector<4x256xf32>, vector<4x256xf32>, vector<4x256xf32> -> vector<36x256xf32>
    %cst_29 = arith.constant dense<0.000000e+00> : vector<4x256xf32>
    %54 = tpu.matmul %4, %53, %cst_29 {dimension_numbers = #tpu.dot_dimension_numbers<[1], [0], [0], [1], [0, 0, 1, 1], [], []>} : vector<4x36xf32>, vector<36x256xf32>, vector<4x256xf32> -> vector<4x256xf32>
    %55 = vector.broadcast %5 : vector<4x1xf32> to vector<4x256xf32>
    %56 = arith.addf %54, %55 : vector<4x256xf32>
    %cst_30 = arith.constant 0.000000e+00 : f32
    %57 = vector.broadcast %cst_30 : f32 to vector<4x256xf32>
    %58 = arith.maximumf %56, %57 : vector<4x256xf32>
    %59 = tpu.concatenate %58, %9 in 0 : vector<4x256xf32>, vector<4x256xf32> -> vector<8x256xf32>
    %cst_31 = arith.constant dense<0.000000e+00> : vector<8x256xf32>
    %60 = tpu.matmul %6, %59, %cst_31 {dimension_numbers = #tpu.dot_dimension_numbers<[1], [0], [0], [1], [0, 0, 1, 1], [], []>} : vector<8x8xf32>, vector<8x256xf32>, vector<8x256xf32> -> vector<8x256xf32>
    %61 = vector.broadcast %7 : vector<8x1xf32> to vector<8x256xf32>
    %62 = arith.addf %60, %61 : vector<8x256xf32>
    %c0_32 = arith.constant 0 : index
    %c0_33 = arith.constant 0 : index
    %c0_34 = arith.constant 0 : index
    %63 = vector.load %arg11[%c0_32, %c0_33, %c0_34] : memref<1x8x256xf32, #tpu.memory_space<vmem>>, vector<1x8x256xf32>
    %64 = vector.shape_cast %63 : vector<1x8x256xf32> to vector<8x256xf32>
    %65 = vector.shape_cast %62 : vector<8x256xf32> to vector<1x8x256xf32>
    tpu.vector_store %arg11[%c0_32, %c0_33, %c0_34], %65 {strides = array<i32>} : memref<1x8x256xf32, #tpu.memory_space<vmem>>, vector<1x8x256xf32>,
    return
  }
  func.func @transform_0(%arg0: i32) -> (i32, i32, i32) {
    %c0_i32 = arith.constant 0 : i32
    %c0_i32_0 = arith.constant 0 : i32
    %c0_i32_1 = arith.constant 0 : i32
    return %arg0, %c0_i32, %c0_i32_0 : i32, i32, i32
  }
  func.func @transform_1(%arg0: i32) -> (i32, i32) {
    %c0_i32 = arith.constant 0 : i32
    %c0_i32_0 = arith.constant 0 : i32
    %c0_i32_1 = arith.constant 0 : i32
    return %c0_i32, %c0_i32_0 : i32, i32
  }
  func.func @transform_2(%arg0: i32) -> (i32, i32) {
    %c0_i32 = arith.constant 0 : i32
    %c0_i32_0 = arith.constant 0 : i32
    %c0_i32_1 = arith.constant 0 : i32
    return %c0_i32, %c0_i32_0 : i32, i32
  }
  func.func @transform_3(%arg0: i32) -> (i32, i32) {
    %c0_i32 = arith.constant 0 : i32
    %c0_i32_0 = arith.constant 0 : i32
    %c0_i32_1 = arith.constant 0 : i32
    return %c0_i32, %c0_i32_0 : i32, i32
  }
  func.func @transform_4(%arg0: i32) -> (i32, i32) {
    %c0_i32 = arith.constant 0 : i32
    %c0_i32_0 = arith.constant 0 : i32
    %c0_i32_1 = arith.constant 0 : i32
    return %c0_i32, %c0_i32_0 : i32, i32
  }
  func.func @transform_5(%arg0: i32) -> (i32, i32) {
    %c0_i32 = arith.constant 0 : i32
    %c0_i32_0 = arith.constant 0 : i32
    %c0_i32_1 = arith.constant 0 : i32
    return %c0_i32, %c0_i32_0 : i32, i32
  }
  func.func @transform_6(%arg0: i32) -> (i32, i32) {
    %c0_i32 = arith.constant 0 : i32
    %c0_i32_0 = arith.constant 0 : i32
    %c0_i32_1 = arith.constant 0 : i32
    return %c0_i32, %c0_i32_0 : i32, i32
  }
  func.func @transform_7(%arg0: i32) -> (i32, i32) {
    %c0_i32 = arith.constant 0 : i32
    %c0_i32_0 = arith.constant 0 : i32
    %c0_i32_1 = arith.constant 0 : i32
    return %c0_i32, %c0_i32_0 : i32, i32
  }
  func.func @transform_8(%arg0: i32) -> (i32, i32) {
    %c0_i32 = arith.constant 0 : i32
    %c0_i32_0 = arith.constant 0 : i32
    %c0_i32_1 = arith.constant 0 : i32
    return %c0_i32, %c0_i32_0 : i32, i32
  }
  func.func @transform_9(%arg0: i32) -> (i32, i32) {
    %c0_i32 = arith.constant 0 : i32
    %c0_i32_0 = arith.constant 0 : i32
    %c0_i32_1 = arith.constant 0 : i32
    return %c0_i32, %c0_i32_0 : i32, i32
  }
  func.func @transform_10(%arg0: i32) -> (i32, i32, i32) {
    %c0_i32 = arith.constant 0 : i32
    %c0_i32_0 = arith.constant 0 : i32
    %c0_i32_1 = arith.constant 0 : i32
    return %arg0, %c0_i32, %c0_i32_0 : i32, i32, i32
  }
}

</mosaic_0001>

<llo_original>
// kernel: residual_pallas.1
$region0: #{residual_pallas.1}
  #allocation0 [shape = 'u32[]', space=smem, size = 0x4, offset = 0x4, fixed_abs, tag = 'smem constant byte address 0x4 - core index']
  #allocation1 [shape = 'u32[144,128]{1,0:T(1,128)}', space=vmem, size = 0x12000, scoped, tag = 'internal scratch']
  %s0 = inlined_call_operand.vmem [shape: f32[2,4,256], index: 0, kind: input, shape index: {}]
  %s1 = inlined_call_operand.vmem [shape: f32[9,256], index: 1, kind: input, shape index: {}]
  %s2 = inlined_call_operand.vmem [shape: f32[4,1], index: 2, kind: input, shape index: {}]
  %s3 = inlined_call_operand.vmem [shape: f32[4,1], index: 3, kind: input, shape index: {}]
  %s4 = inlined_call_operand.vmem [shape: f32[4,4], index: 4, kind: input, shape index: {}]
  %s5 = inlined_call_operand.vmem [shape: f32[4,1], index: 5, kind: input, shape index: {}]
  %s6 = inlined_call_operand.vmem [shape: f32[4,36], index: 6, kind: input, shape index: {}]
  %s7 = inlined_call_operand.vmem [shape: f32[4,1], index: 7, kind: input, shape index: {}]
  %s8 = inlined_call_operand.vmem [shape: f32[8,8], index: 8, kind: input, shape index: {}]
  %s9 = inlined_call_operand.vmem [shape: f32[8,1], index: 9, kind: input, shape index: {}]
  %s10 = inlined_call_operand.vmem [shape: f32[2,8,256], index: 10, kind: output, shape index: {}]
  %s11 = sld [smem:[#allocation0]]
  $region73: #{residual_pallas.1} parent=0
    _
  %s13 = ssub.s32 1, %s11
  %s14 = scalar_select 0, %s13, %s11
  loop: start=0, step=1, limit=4
  $region2: #{residual_pallas.1} parent=0 // loop_pre_header
    _
  $region3: #{residual_pallas.1} parent=0 // loop_header
    %s16 = sphi 0, %s20
    %p17 = scmp.ge.s32.totalorder %s16, 4
    %s26 = sphi 0, %s28
    %s29 = sphi 0, %s26
    %s30 = sphi 0, %s29
    %s46 = sphi 0, %s30
    %s50 = sphi 0, %s50
    %s52 = sphi 0, %s50
    %s53 = sphi 0, %s52
    %s67 = sphi 0, %s53
    %s71 = sphi 0, %s71
    %s73 = sphi 0, %s71
    %s74 = sphi 0, %s73
    %s88 = sphi 0, %s74
    %s92 = sphi 0, %s92
    %s94 = sphi 0, %s92
    %s95 = sphi 0, %s94
    %s109 = sphi 0, %s95
    %s113 = sphi 0, %s113
    %s115 = sphi 0, %s113
    %s116 = sphi 0, %s115
    %s130 = sphi 0, %s116
    %s134 = sphi 0, %s134
    %s136 = sphi 0, %s134
    %s137 = sphi 0, %s136
    %s151 = sphi 0, %s137
    %s155 = sphi 0, %s155
    %s157 = sphi 0, %s155
    %s158 = sphi 0, %s157
    %s172 = sphi 0, %s158
    %s176 = sphi 0, %s176
    %s178 = sphi 0, %s176
    %s179 = sphi 0, %s178
    %s193 = sphi 0, %s179
    %s197 = sphi 0, %s197
    %s199 = sphi 0, %s197
    %s200 = sphi 0, %s199
    %s214 = sphi 0, %s200
    %s218 = sphi 0, %s218
    %s220 = sphi 0, %s218
    %s221 = sphi 0, %s220
    %s235 = sphi 0, %s221
    %s241 = sphi 0, %s243
    %s244 = sphi 0, %s241
    %s245 = sphi 0, %s244
    %s261 = sphi 0, %s245
  $region4: #{residual_pallas.1} parent=0 // loop_header_branch
    %19 = sbr.rel (%p17) target = $region8
  $region5: #{residual_pallas.1} parent=0 // loop_body
    %s21 = ssub.s32 %s16, 1
    %s22 = ssub.s32 %s16, 2
    %s23 = sadd.s32 %s16, 1
    %s24 = ssub.s32 %s16, %s23
    %p25 = scmp.eq.s32.totalorder %s24, 0
    %s27 = sadd.s32 %s26, 1
    %s28 = scalar_select %p25, %s26, %s27
    %p31 = pneg %p25
    %p32 = scmp.eq.s32.totalorder %s16, 1
    %p33 = por %p31, %p32
    %p34 = scmp.ne.s32.totalorder %s26, %s29
    %p35 = scmp.eq.s32.totalorder %s16, 0
    %p36 = por %p34, %p35
    %p37 = scmp.ne.s32.totalorder %s26, %s29
    %p38 = scmp.eq.s32.totalorder %s21, 1
    %p39 = por %p37, %p38
    %p40 = scmp.ne.s32.totalorder %s29, %s30
    %p41 = scmp.eq.s32.totalorder %s21, 0
    %p42 = por %p40, %p41
    %p43 = scmp.ne.s32.totalorder %s29, %s30
    %p44 = scmp.eq.s32.totalorder %s22, 1
    %p45 = por %p43, %p44
    %p47 = scmp.ne.s32.totalorder %s30, %s46
    %p48 = scmp.eq.s32.totalorder %s22, 0
    %p49 = por %p47, %p48
    %s51 = sadd.s32 %s50, 1
    %p54 = scmp.eq.s32.totalorder %s16, 1
    %p55 = scmp.ne.s32.totalorder %s50, %s52
    %p56 = scmp.eq.s32.totalorder %s16, 0
    %p57 = por %p55, %p56
    %p58 = scmp.ne.s32.totalorder %s50, %s52
    %p59 = scmp.eq.s32.totalorder %s21, 1
    %p60 = por %p58, %p59
    %p61 = scmp.ne.s32.totalorder %s52, %s53
    %p62 = scmp.eq.s32.totalorder %s21, 0
    %p63 = por %p61, %p62
    %p64 = scmp.ne.s32.totalorder %s52, %s53
    %p65 = scmp.eq.s32.totalorder %s22, 1
    %p66 = por %p64, %p65
    %p68 = scmp.ne.s32.totalorder %s53, %s67
    %p69 = scmp.eq.s32.totalorder %s22, 0
    %p70 = por %p68, %p69
    %s72 = sadd.s32 %s71, 1
    %p75 = scmp.eq.s32.totalorder %s16, 1
    %p76 = scmp.ne.s32.totalorder %s71, %s73
    %p77 = scmp.eq.s32.totalorder %s16, 0
    %p78 = por %p76, %p77
    %p79 = scmp.ne.s32.totalorder %s71, %s73
    %p80 = scmp.eq.s32.totalorder %s21, 1
    %p81 = por %p79, %p80
    %p82 = scmp.ne.s32.totalorder %s73, %s74
    %p83 = scmp.eq.s32.totalorder %s21, 0
    %p84 = por %p82, %p83
    %p85 = scmp.ne.s32.totalorder %s73, %s74
    %p86 = scmp.eq.s32.totalorder %s22, 1
    %p87 = por %p85, %p86
    %p89 = scmp.ne.s32.totalorder %s74, %s88
    %p90 = scmp.eq.s32.totalorder %s22, 0
    %p91 = por %p89, %p90
    %s93 = sadd.s32 %s92, 1
    %p96 = scmp.eq.s32.totalorder %s16, 1
    %p97 = scmp.ne.s32.totalorder %s92, %s94
    %p98 = scmp.eq.s32.totalorder %s16, 0
    %p99 = por %p97, %p98
    %p100 = scmp.ne.s32.totalorder %s92, %s94
    %p101 = scmp.eq.s32.totalorder %s21, 1
    %p102 = por %p100, %p101
    %p103 = scmp.ne.s32.totalorder %s94, %s95
    %p104 = scmp.eq.s32.totalorder %s21, 0
    %p105 = por %p103, %p104
    %p106 = scmp.ne.s32.totalorder %s94, %s95
    %p107 = scmp.eq.s32.totalorder %s22, 1
    %p108 = por %p106, %p107
    %p110 = scmp.ne.s32.totalorder %s95, %s109
    %p111 = scmp.eq.s32.totalorder %s22, 0
    %p112 = por %p110, %p111
    %s114 = sadd.s32 %s113, 1
    %p117 = scmp.eq.s32.totalorder %s16, 1
    %p118 = scmp.ne.s32.totalorder %s113, %s115
    %p119 = scmp.eq.s32.totalorder %s16, 0
    %p120 = por %p118, %p119
    %p121 = scmp.ne.s32.totalorder %s113, %s115
    %p122 = scmp.eq.s32.totalorder %s21, 1
    %p123 = por %p121, %p122
    %p124 = scmp.ne.s32.totalorder %s115, %s116
    %p125 = scmp.eq.s32.totalorder %s21, 0
    %p126 = por %p124, %p125
    %p127 = scmp.ne.s32.totalorder %s115, %s116
    %p128 = scmp.eq.s32.totalorder %s22, 1
    %p129 = por %p127, %p128
    %p131 = scmp.ne.s32.totalorder %s116, %s130
    %p132 = scmp.eq.s32.totalorder %s22, 0
    %p133 = por %p131, %p132
    %s135 = sadd.s32 %s134, 1
    %p138 = scmp.eq.s32.totalorder %s16, 1
    %p139 = scmp.ne.s32.totalorder %s134, %s136
    %p140 = scmp.eq.s32.totalorder %s16, 0
    %p141 = por %p139, %p140
    %p142 = scmp.ne.s32.totalorder %s134, %s136
    %p143 = scmp.eq.s32.totalorder %s21, 1
    %p144 = por %p142, %p143
    %p145 = scmp.ne.s32.totalorder %s136, %s137
    %p146 = scmp.eq.s32.totalorder %s21, 0
    %p147 = por %p145, %p146
    %p148 = scmp.ne.s32.totalorder %s136, %s137
    %p149 = scmp.eq.s32.totalorder %s22, 1
    %p150 = por %p148, %p149
    %p152 = scmp.ne.s32.totalorder %s137, %s151
    %p153 = scmp.eq.s32.totalorder %s22, 0
    %p154 = por %p152, %p153
    %s156 = sadd.s32 %s155, 1
    %p159 = scmp.eq.s32.totalorder %s16, 1
    %p160 = scmp.ne.s32.totalorder %s155, %s157
    %p161 = scmp.eq.s32.totalorder %s16, 0
    %p162 = por %p160, %p161
    %p163 = scmp.ne.s32.totalorder %s155, %s157
    %p164 = scmp.eq.s32.totalorder %s21, 1
    %p165 = por %p163, %p164
    %p166 = scmp.ne.s32.totalorder %s157, %s158
    %p167 = scmp.eq.s32.totalorder %s21, 0
    %p168 = por %p166, %p167
    %p169 = scmp.ne.s32.totalorder %s157, %s158
    %p170 = scmp.eq.s32.totalorder %s22, 1
    %p171 = por %p169, %p170
    %p173 = scmp.ne.s32.totalorder %s158, %s172
    %p174 = scmp.eq.s32.totalorder %s22, 0
    %p175 = por %p173, %p174
    %s177 = sadd.s32 %s176, 1
    %p180 = scmp.eq.s32.totalorder %s16, 1
    %p181 = scmp.ne.s32.totalorder %s176, %s178
    %p182 = scmp.eq.s32.totalorder %s16, 0
    %p183 = por %p181, %p182
    %p184 = scmp.ne.s32.totalorder %s176, %s178
    %p185 = scmp.eq.s32.totalorder %s21, 1
    %p186 = por %p184, %p185
    %p187 = scmp.ne.s32.totalorder %s178, %s179
    %p188 = scmp.eq.s32.totalorder %s21, 0
    %p189 = por %p187, %p188
    %p190 = scmp.ne.s32.totalorder %s178, %s179
    %p191 = scmp.eq.s32.totalorder %s22, 1
    %p192 = por %p190, %p191
    %p194 = scmp.ne.s32.totalorder %s179, %s193
    %p195 = scmp.eq.s32.totalorder %s22, 0
    %p196 = por %p194, %p195
    %s198 = sadd.s32 %s197, 1
    %p201 = scmp.eq.s32.totalorder %s16, 1
    %p202 = scmp.ne.s32.totalorder %s197, %s199
    %p203 = scmp.eq.s32.totalorder %s16, 0
    %p204 = por %p202, %p203
    %p205 = scmp.ne.s32.totalorder %s197, %s199
    %p206 = scmp.eq.s32.totalorder %s21, 1
    %p207 = por %p205, %p206
    %p208 = scmp.ne.s32.totalorder %s199, %s200
    %p209 = scmp.eq.s32.totalorder %s21, 0
    %p210 = por %p208, %p209
    %p211 = scmp.ne.s32.totalorder %s199, %s200
    %p212 = scmp.eq.s32.totalorder %s22, 1
    %p213 = por %p211, %p212
    %p215 = scmp.ne.s32.totalorder %s200, %s214
    %p216 = scmp.eq.s32.totalorder %s22, 0
    %p217 = por %p215, %p216
    %s219 = sadd.s32 %s218, 1
    %p222 = scmp.eq.s32.totalorder %s16, 1
    %p223 = scmp.ne.s32.totalorder %s218, %s220
    %p224 = scmp.eq.s32.totalorder %s16, 0
    %p225 = por %p223, %p224
    %p226 = scmp.ne.s32.totalorder %s218, %s220
    %p227 = scmp.eq.s32.totalorder %s21, 1
    %p228 = por %p226, %p227
    %p229 = scmp.ne.s32.totalorder %s220, %s221
    %p230 = scmp.eq.s32.totalorder %s21, 0
    %p231 = por %p229, %p230
    %p232 = scmp.ne.s32.totalorder %s220, %s221
    %p233 = scmp.eq.s32.totalorder %s22, 1
    %p234 = por %p232, %p233
    %p236 = scmp.ne.s32.totalorder %s221, %s235
    %p237 = scmp.eq.s32.totalorder %s22, 0
    %p238 = por %p236, %p237
    %s239 = ssub.s32 %s16, %s23
    %p240 = scmp.eq.s32.totalorder %s239, 0
    %s242 = sadd.s32 %s241, 1
    %s243 = scalar_select %p240, %s241, %s242
    %p246 = pneg %p240
    %p247 = scmp.eq.s32.totalorder %s16, 1
    %p248 = por %p246, %p247
    %p249 = scmp.ne.s32.totalorder %s241, %s244
    %p250 = scmp.eq.s32.totalorder %s16, 0
    %p251 = por %p249, %p250
    %p252 = scmp.ne.s32.totalorder %s241, %s244
    %p253 = scmp.eq.s32.totalorder %s21, 1
    %p254 = por %p252, %p253
    %p255 = scmp.ne.s32.totalorder %s244, %s245
    %p256 = scmp.eq.s32.totalorder %s21, 0
    %p257 = por %p255, %p256
    %p258 = scmp.ne.s32.totalorder %s244, %s245
    %p259 = scmp.eq.s32.totalorder %s22, 1
    %p260 = por %p258, %p259
    %p262 = scmp.ne.s32.totalorder %s245, %s261
    %p263 = scmp.eq.s32.totalorder %s22, 0
    %p264 = por %p262, %p263
    %p265 = scmp.le.s32.totalorder 1, %s16
    %p266 = scmp.lt.s32.totalorder %s16, 3
    %p267 = pnand %p265, %p266
    %p268 = pneg %p267
    // Predicated region
    $region9: #{residual_pallas.1} parent=5 // pred_check
      _
    $region10: #{residual_pallas.1} parent=5 // pred_check_branch
      %270 = sbr.rel (%p267) target = $region12
    $region11: #{residual_pallas.1} parent=5 // pred_region
      %s271 = ssub.s32 %s16, 1
      // Predicated region
      $region13: #{residual_pallas.1} parent=11 // pred_check
        %p272 = pneg %p63
      $region14: #{residual_pallas.1} parent=11 // pred_check_branch
        %274 = sbr.rel (%p272) target = $region16
      $region15: #{residual_pallas.1} parent=11 // pred_region
        _
      $region16: #{residual_pallas.1} parent=11 // pred_fallthru
        _
      // Predicated region
      $region17: #{residual_pallas.1} parent=11 // pred_check
        %p275 = pneg %p84
      $region18: #{residual_pallas.1} parent=11 // pred_check_branch
        %277 = sbr.rel (%p275) target = $region20
      $region19: #{residual_pallas.1} parent=11 // pred_region
        _
      $region20: #{residual_pallas.1} parent=11 // pred_fallthru
        _
      // Predicated region
      $region21: #{residual_pallas.1} parent=11 // pred_check
        %p278 = pneg %p105
      $region22: #{residual_pallas.1} parent=11 // pred_check_branch
        %280 = sbr.rel (%p278) target = $region24
      $region23: #{residual_pallas.1} parent=11 // pred_region
        _
      $region24: #{residual_pallas.1} parent=11 // pred_fallthru
        _
      // Predicated region
      $region25: #{residual_pallas.1} parent=11 // pred_check
        %p281 = pneg %p126
      $region26: #{residual_pallas.1} parent=11 // pred_check_branch
        %283 = sbr.rel (%p281) target = $region28
      $region27: #{residual_pallas.1} parent=11 // pred_region
        _
      $region28: #{residual_pallas.1} parent=11 // pred_fallthru
        _
      // Predicated region
      $region29: #{residual_pallas.1} parent=11 // pred_check
        %p284 = pneg %p147
      $region30: #{residual_pallas.1} parent=11 // pred_check_branch
        %286 = sbr.rel (%p284) target = $region32
      $region31: #{residual_pallas.1} parent=11 // pred_region
        _
      $region32: #{residual_pallas.1} parent=11 // pred_fallthru
        _
      // Predicated region
      $region33: #{residual_pallas.1} parent=11 // pred_check
        %p287 = pneg %p168
      $region34: #{residual_pallas.1} parent=11 // pred_check_branch
        %289 = sbr.rel (%p287) target = $region36
      $region35: #{residual_pallas.1} parent=11 // pred_region
        _
      $region36: #{residual_pallas.1} parent=11 // pred_fallthru
        _
      // Predicated region
      $region37: #{residual_pallas.1} parent=11 // pred_check
        %p290 = pneg %p189
      $region38: #{residual_pallas.1} parent=11 // pred_check_branch
        %292 = sbr.rel (%p290) target = $region40
      $region39: #{residual_pallas.1} parent=11 // pred_region
        _
      $region40: #{residual_pallas.1} parent=11 // pred_fallthru
        _
      // Predicated region
      $region41: #{residual_pallas.1} parent=11 // pred_check
        %p293 = pneg %p210
      $region42: #{residual_pallas.1} parent=11 // pred_check_branch
        %295 = sbr.rel (%p293) target = $region44
      $region43: #{residual_pallas.1} parent=11 // pred_region
        _
      $region44: #{residual_pallas.1} parent=11 // pred_fallthru
        _
      // Predicated region
      $region45: #{residual_pallas.1} parent=11 // pred_check
        %p296 = pneg %p231
      $region46: #{residual_pallas.1} parent=11 // pred_check_branch
        %298 = sbr.rel (%p296) target = $region48
      $region47: #{residual_pallas.1} parent=11 // pred_region
        _
      $region48: #{residual_pallas.1} parent=11 // pred_fallthru
        _
    $region12: #{residual_pallas.1} parent=5 // pred_fallthru
      _
    %p299 = scmp.lt.s32.totalorder %s16, 2
    // Predicated region
    $region49: #{residual_pallas.1} parent=5 // pred_check
      %p300 = pneg %p299
    $region50: #{residual_pallas.1} parent=5 // pred_check_branch
      %302 = sbr.rel (%p300) target = $region52
    $region51: #{residual_pallas.1} parent=5 // pred_region
      // Predicated region
      $region53: #{residual_pallas.1} parent=51 // pred_check
        %p303 = pneg %p36
      $region54: #{residual_pallas.1} parent=51 // pred_check_branch
        %305 = sbr.rel (%p303) target = $region56
      $region55: #{residual_pallas.1} parent=51 // pred_region
        %p306 = scmp.lt.s32.totalorder %s16, 1
        %s307 = scalar_select %p306, %s16, 1
        %s308 = smul.addr %s307, 2
        %s309 = smul.addr %s308, 4
        %s310 = scalar_lea.vmem %s0, %s309
      $region56: #{residual_pallas.1} parent=51 // pred_fallthru
        _
    $region52: #{residual_pallas.1} parent=5 // pred_fallthru
      _
    %p311 = scmp.le.s32.totalorder 1, %s16
    %p312 = scmp.lt.s32.totalorder %s16, 3
    %p313 = pnand %p311, %p312
    %p314 = pneg %p313
    // Predicated region
    $region57: #{residual_pallas.1} parent=5 // pred_check
      _
    $region58: #{residual_pallas.1} parent=5 // pred_check_branch
      %316 = sbr.rel (%p313) target = $region60
    $region59: #{residual_pallas.1} parent=5 // pred_region
      %s317 = ssub.s32 %s16, 1
      %p318 = scmp.lt.s32.totalorder %s21, 1
      %s319 = scalar_select %p318, %s21, 1
      %s320 = smul.addr %s319, 2
      %s321 = smul.addr %s320, 4
      %s322 = scalar_lea.vmem %s0, %s321
      %p323 = pneg %p42
      %p324 = pneg %p39
      %p325 = pneg %p63
      %p326 = pneg %p60
      %p327 = pneg %p84
      %p328 = pneg %p81
      %p329 = pneg %p105
      %p330 = pneg %p102
      %p331 = pneg %p126
      %p332 = pneg %p123
      %p333 = pneg %p147
      %p334 = pneg %p144
      %p335 = pneg %p168
      %p336 = pneg %p165
      %p337 = pneg %p189
      %p338 = pneg %p186
      %p339 = pneg %p210
      %p340 = pneg %p207
      %p341 = pneg %p231
      %p342 = pneg %p228
      %p343 = pneg %p257
      %p344 = pneg %p254
      %p345 = scmp.lt.s32.totalorder %s21, 1
      %s346 = scalar_select %p345, %s21, 1
      %s347 = smul.addr %s346, 2
      %s348 = smul.addr %s347, 8
      %s349 = scalar_lea.vmem %s10, %s348
      %p350 = scmp.lt.s32.totalorder %s21, 1
      %s351 = scalar_select %p350, %s21, 1
      %s352 = smul.addr %s351, 2
      %s353 = smul.addr %s352, 4
      %s354 = scalar_lea.vmem %s0, %s353
      %p355 = scmp.lt.s32.totalorder %s21, 1
      %s356 = scalar_select %p355, %s21, 1
      %s357 = smul.addr %s356, 2
      %s358 = smul.addr %s357, 8
      %s359 = scalar_lea.vmem %s10, %s358
      %v360 = vld [vmem:[%s2] sm:$0xf]
      %v361 = vld [vmem:[%s3] sm:$0xf]
      %v362 = vld [vmem:[%s4] sm:$0xf]
      %v363 = vld [vmem:[%s5] sm:$0xf]
      %v364 = vld [vmem:[%s6] sm:$0xf]
      %v365 = vld [vmem:[%s7] sm:$0xf]
      %v366 = vld [vmem:[%s8] sm:$0xff]
      %v367 = vld [vmem:[%s9] sm:$0xff]
      %v368 = vld [vmem:[%s354] sm:$0xff]
      %370 = vset.pattern.permute.xlu0 0
      %371 = vperm.xlu0 %370, %v360
      %v372 = vpop.permute.xlu0 %371
      %v374 = vunpack.c.l.s4 839922192
      %v375 = vunpack.c.0.s8 %v374
      %v376 = vlaneseq
      %v377 = vshrl.u32 %v376, 7
      %v378 = vsub.s32 %v375, %v377
      %v379 = vrot.slane %v372, %v378
      %v381 = vmul.f32 %v368, %v379
      %383 = vset.pattern.permute.xlu0 0
      %384 = vperm.xlu0 %383, %v361
      %v385 = vpop.permute.xlu0 %384
      %v387 = vunpack.c.l.s4 839922192
      %v388 = vunpack.c.0.s8 %v387
      %v389 = vlaneseq
      %v390 = vshrl.u32 %v389, 7
      %v391 = vsub.s32 %v388, %v390
      %v392 = vrot.slane %v385, %v391
      %v394 = vadd.f32 %v381, %v392
      %v395 = vmax.f32 %v394, 0.0
      %397 = vset.pattern.permute.xlu0 0
      %398 = vperm.xlu0 %397, %v363
      %v399 = vpop.permute.xlu0 %398
      %v402 = vcombine.high %v395, %v395
      %vm403 = vcmask 31744
      %v405 = vsel %vm403, %v362, 0
      %vm407 = vcmask 1043456
      %v408 = vsel %vm407, %v395, 0
      %v410 = vsel %vm407, %v402, 0
      %412 = vmatprep.subr.mxu0 0.0
      %413 = vmatpush1.msra.mxu0 0.0
      %414 = vmatprep.subr.mxu0 0.0
      %415 = vmatpush1.msra.mxu0 0.0
      %416 = vmatprep.subr.mxu0 0.0
      %417 = vmatpush1.msra.mxu0 0.0
      %418 = vmatprep.subr.mxu0 0.0
      %419 = vmatpush1.msra.mxu0 0.0
      %420 = vmatprep.subr.mxu0 0.0
      %421 = vmatpush1.msra.mxu0 0.0
      %422 = vmatprep.subr.mxu0 0.0
      %423 = vmatpush1.msra.mxu0 0.0
      %424 = vmatprep.subr.mxu0 0.0
      %425 = vmatpush1.msra.mxu0 0.0
      %426 = vmatprep.subr.mxu0 0.0
      %427 = vmatpush1.msra.mxu0 0.0
      %428 = vmatprep.subr.mxu0 0.0
      %429 = vmatpush1.msra.mxu0 0.0
      %430 = vmatprep.subr.mxu0 0.0
      %431 = vmatpush1.msra.mxu0 0.0
      %432 = vmatprep.subr.mxu0 0.0
      %433 = vmatpush1.msra.mxu0 0.0
      %434 = vmatprep.subr.mxu0 0.0
      %435 = vmatpush1.msra.mxu0 0.0
      %436 = vmatprep.subr.mxu0 0.0
      %437 = vmatpush1.msra.mxu0 0.0
      %438 = vmatprep.subr.mxu0 0.0
      %439 = vmatpush1.msra.mxu0 0.0
      %440 = vmatprep.subr.mxu0 0.0
      %441 = vmatpush1.msra.mxu0 0.0
      %442 = vmatprep.subr.mxu0 %v410
      %443 = vmatpush1.msra.mxu0 %v408
      %444 = vmatprep.subr.mxu0 0.0
      %445 = vmatpush2.msra.mxu0 0.0
      %446 = vmatprep.subr.mxu0 0.0
      %447 = vmatpush2.msra.mxu0 0.0
      %448 = vmatprep.subr.mxu0 0.0
      %449 = vmatpush2.msra.mxu0 0.0
      %450 = vmatprep.subr.mxu0 0.0
      %451 = vmatpush2.msra.mxu0 0.0
      %452 = vmatprep.subr.mxu0 0.0
      %453 = vmatpush2.msra.mxu0 0.0
      %454 = vmatprep.subr.mxu0 0.0
      %455 = vmatpush2.msra.mxu0 0.0
      %456 = vmatprep.subr.mxu0 0.0
      %457 = vmatpush2.msra.mxu0 0.0
      %458 = vmatprep.subr.mxu0 0.0
      %459 = vmatpush2.msra.mxu0 0.0
      %460 = vmatprep.subr.mxu0 0.0
      %461 = vmatpush2.msra.mxu0 0.0
      %462 = vmatprep.subr.mxu0 0.0
      %463 = vmatpush2.msra.mxu0 0.0
      %464 = vmatprep.subr.mxu0 0.0
      %465 = vmatpush2.msra.mxu0 0.0
      %466 = vmatprep.subr.mxu0 0.0
      %467 = vmatpush2.msra.mxu0 0.0
      %468 = vmatprep.subr.mxu0 0.0
      %469 = vmatpush2.msra.mxu0 0.0
      %470 = vmatprep.subr.mxu0 0.0
      %471 = vmatpush2.msra.mxu0 0.0
      %472 = vmatprep.subr.mxu0 0.0
      %473 = vmatpush2.msra.mxu0 0.0
      %474 = vmatprep.subr.mxu0 0.0
      %475 = vmatpush2.msra.mxu0 0.0
      %476 = vmatprep.mubr.f32.mxu0 0.0
      %477 = vmatmul.mubr.f32.gmra.mxu0 %v405
      %v478 = vpop.f32.mrf.mxu0
      %v479 = vadd.f32 %v399, %v478
      %v480 = vpop.f32.mrf.mxu0
      %v481 = vadd.f32 %v399, %v480
      %482 = vdwg.mxu0
      %v483 = vmax.f32 %v479, 0.0
      %v484 = vmax.f32 %v481, 0.0
      %485 = vrot.lane.b32.xlu0 %v483, 17
      %v486 = vpop.permute.xlu0 %485
      %487 = vrot.lane.b32.xlu0 %v484, 17
      %v488 = vpop.permute.xlu0 %487
      %v489 = vlaneseq
      %v490 = vand.u32 %v489, 127
      %vm491 = vcmp.lt.s32.totalorder %v490, 17
      %v492 = vsel %vm491, %v486, %v488
      %v493 = vsel %vm491, %v488, %v486
      %v494 = vld [vmem:[%s1] ss:$8 sm:$0x3]
      %v496 = vlaneseq
      %v497 = vshrl.u32 %v496, 7
      %v498 = vsub.s32 0, %v497
      %v499 = vrot.slane %v494, %v498
      %v500 = vlaneseq
      %v501 = vshrl.u32 %v500, 7
      %v502 = vsub.s32 1, %v501
      %v503 = vrot.slane %v494, %v502
      %v506 = vmul.f32 %v493, %v499
      %v507 = vmul.f32 %v492, %v503
      %508 = vrot.lane.b32.xlu0 %v483, 16
      %v509 = vpop.permute.xlu0 %508
      %510 = vrot.lane.b32.xlu0 %v484, 16
      %v511 = vpop.permute.xlu0 %510
      %vm512 = vcmp.lt.s32.totalorder %v490, 16
      %v513 = vsel %vm512, %v509, %v511
      %v514 = vsel %vm512, %v511, %v509
      %s515 = scalar_lea.vmem %s1, 1
      %v516 = vld [vmem:[%s515] ss:$8 sm:$0x3]
      %v518 = vlaneseq
      %v519 = vshrl.u32 %v518, 7
      %v520 = vsub.s32 0, %v519
      %v521 = vrot.slane %v516, %v520
      %v522 = vlaneseq
      %v523 = vshrl.u32 %v522, 7
      %v524 = vsub.s32 1, %v523
      %v525 = vrot.slane %v516, %v524
      %v528 = vmul.f32 %v514, %v521
      %v529 = vmul.f32 %v513, %v525
      %530 = vrot.lane.b32.xlu0 %v483, 15
      %v531 = vpop.permute.xlu0 %530
      %532 = vrot.lane.b32.xlu0 %v484, 15
      %v533 = vpop.permute.xlu0 %532
      %vm534 = vcmp.lt.s32.totalorder %v490, 15
      %v535 = vsel %vm534, %v531, %v533
      %v536 = vsel %vm534, %v533, %v531
      %s537 = scalar_lea.vmem %s1, 2
      %v538 = vld [vmem:[%s537] ss:$8 sm:$0x3]
      %v540 = vlaneseq
      %v541 = vshrl.u32 %v540, 7
      %v542 = vsub.s32 0, %v541
      %v543 = vrot.slane %v538, %v542
      %v544 = vlaneseq
      %v545 = vshrl.u32 %v544, 7
      %v546 = vsub.s32 1, %v545
      %v547 = vrot.slane %v538, %v546
      %v550 = vmul.f32 %v536, %v543
      %v551 = vmul.f32 %v535, %v547
      %552 = vrot.lane.b32.xlu0 %v483, 1
      %v553 = vpop.permute.xlu0 %552
      %554 = vrot.lane.b32.xlu0 %v484, 1
      %v555 = vpop.permute.xlu0 %554
      %vm556 = vcmp.lt.s32.totalorder %v490, 1
      %v557 = vsel %vm556, %v553, %v555
      %v558 = vsel %vm556, %v555, %v553
      %s559 = scalar_lea.vmem %s1, 3
      %v560 = vld [vmem:[%s559] ss:$8 sm:$0x3]
      %v562 = vlaneseq
      %v563 = vshrl.u32 %v562, 7
      %v564 = vsub.s32 0, %v563
      %v565 = vrot.slane %v560, %v564
      %v566 = vlaneseq
      %v567 = vshrl.u32 %v566, 7
      %v568 = vsub.s32 1, %v567
      %v569 = vrot.slane %v560, %v568
      %v572 = vmul.f32 %v558, %v565
      %v573 = vmul.f32 %v557, %v569
      %574 = vrot.lane.b32.xlu0 %v483, 127
      %v575 = vpop.permute.xlu0 %574
      %576 = vrot.lane.b32.xlu0 %v484, 127
      %v577 = vpop.permute.xlu0 %576
      %vm578 = vcmp.lt.s32.totalorder %v490, 127
      %v579 = vsel %vm578, %v575, %v577
      %v580 = vsel %vm578, %v577, %v575
      %s581 = scalar_lea.vmem %s1, 5
      %v582 = vld [vmem:[%s581] ss:$8 sm:$0x3]
      %v584 = vlaneseq
      %v585 = vshrl.u32 %v584, 7
      %v586 = vsub.s32 0, %v585
      %v587 = vrot.slane %v582, %v586
      %v588 = vlaneseq
      %v589 = vshrl.u32 %v588, 7
      %v590 = vsub.s32 1, %v589
      %v591 = vrot.slane %v582, %v590
      %v594 = vmul.f32 %v579, %v587
      %v595 = vmul.f32 %v580, %v591
      %596 = vrot.lane.b32.xlu0 %v483, 113
      %v597 = vpop.permute.xlu0 %596
      %598 = vrot.lane.b32.xlu0 %v484, 113
      %v599 = vpop.permute.xlu0 %598
      %vm600 = vcmp.lt.s32.totalorder %v490, 113
      %v601 = vsel %vm600, %v597, %v599
      %v602 = vsel %vm600, %v599, %v597
      %s603 = scalar_lea.vmem %s1, 6
      %v604 = vld [vmem:[%s603] ss:$8 sm:$0x3]
      %v606 = vlaneseq
      %v607 = vshrl.u32 %v606, 7
      %v608 = vsub.s32 0, %v607
      %v609 = vrot.slane %v604, %v608
      %v610 = vlaneseq
      %v611 = vshrl.u32 %v610, 7
      %v612 = vsub.s32 1, %v611
      %v613 = vrot.slane %v604, %v612
      %v616 = vmul.f32 %v601, %v609
      %v617 = vmul.f32 %v602, %v613
      %618 = vrot.lane.b32.xlu0 %v483, 112
      %v619 = vpop.permute.xlu0 %618
      %620 = vrot.lane.b32.xlu0 %v484, 112
      %v621 = vpop.permute.xlu0 %620
      %vm622 = vcmp.lt.s32.totalorder %v490, 112
      %v623 = vsel %vm622, %v619, %v621
      %v624 = vsel %vm622, %v621, %v619
      %s625 = scalar_lea.vmem %s1, 7
      %v626 = vld [vmem:[%s625] ss:$8 sm:$0x3]
      %v628 = vlaneseq
      %v629 = vshrl.u32 %v628, 7
      %v630 = vsub.s32 0, %v629
      %v631 = vrot.slane %v626, %v630
      %v632 = vlaneseq
      %v633 = vshrl.u32 %v632, 7
      %v634 = vsub.s32 1, %v633
      %v635 = vrot.slane %v626, %v634
      %v638 = vmul.f32 %v623, %v631
      %v639 = vmul.f32 %v624, %v635
      %640 = vrot.lane.b32.xlu0 %v483, 111
      %v641 = vpop.permute.xlu0 %640
      %642 = vrot.lane.b32.xlu0 %v484, 111
      %v643 = vpop.permute.xlu0 %642
      %vm644 = vcmp.lt.s32.totalorder %v490, 111
      %v645 = vsel %vm644, %v641, %v643
      %v646 = vsel %vm644, %v643, %v641
      %s647 = scalar_lea.vmem %s1, 16
      %v648 = vld [vmem:[%s647] ss:$8 sm:$0x3]
      %v650 = vlaneseq
      %v651 = vshrl.u32 %v650, 7
      %v652 = vsub.s32 0, %v651
      %v653 = vrot.slane %v648, %v652
      %v654 = vlaneseq
      %v655 = vshrl.u32 %v654, 7
      %v656 = vsub.s32 1, %v655
      %v657 = vrot.slane %v648, %v656
      %v660 = vmul.f32 %v645, %v653
      %v661 = vmul.f32 %v646, %v657
      %v664 = vrot.slane %v528, 4
      %v665 = vrot.slane %v529, 4
      %v670 = vrot.slane %v572, 4
      %v671 = vrot.slane %v573, 4
      %v676 = vrot.slane %v594, 4
      %v677 = vrot.slane %v595, 4
      %v682 = vrot.slane %v638, 4
      %v683 = vrot.slane %v639, 4
      %v686 = vsel %vm407, %v506, %v664
      %v687 = vsel %vm407, %v507, %v665
      %v688 = vsel %vm407, %v550, %v670
      %v689 = vsel %vm407, %v551, %v671
      %v690 = vsel %vm407, %v483, %v676
      %v691 = vsel %vm407, %v484, %v677
      %v692 = vsel %vm407, %v616, %v682
      %v693 = vsel %vm407, %v617, %v683
      %695 = vset.pattern.permute.xlu0 0
      %696 = vperm.xlu0 %695, %v365
      %v697 = vpop.permute.xlu0 %696
      %vm699 = vcmask 293888
      %v701 = vsel %vm699, %v364, 0
      %v704 = vsel %vm407, %v660, 0
      %v707 = vsel %vm407, %v661, 0
      %709 = vmatprep.subr.mxu0 0.0
      %710 = vmatpush1.msra.mxu0 0.0
      %711 = vmatprep.subr.mxu0 0.0
      %712 = vmatpush1.msra.mxu0 0.0
      %713 = vmatprep.subr.mxu0 0.0
      %714 = vmatpush1.msra.mxu0 0.0
      %715 = vmatprep.subr.mxu0 0.0
      %716 = vmatpush1.msra.mxu0 0.0
      %717 = vmatprep.subr.mxu0 0.0
      %718 = vmatpush1.msra.mxu0 0.0
      %719 = vmatprep.subr.mxu0 0.0
      %720 = vmatpush1.msra.mxu0 0.0
      %721 = vmatprep.subr.mxu0 0.0
      %722 = vmatpush1.msra.mxu0 0.0
      %723 = vmatprep.subr.mxu0 0.0
      %724 = vmatpush1.msra.mxu0 0.0
      %725 = vmatprep.subr.mxu0 0.0
      %726 = vmatpush1.msra.mxu0 0.0
      %727 = vmatprep.subr.mxu0 0.0
      %728 = vmatpush1.msra.mxu0 0.0
      %729 = vmatprep.subr.mxu0 0.0
      %730 = vmatpush1.msra.mxu0 0.0
      %731 = vmatprep.subr.mxu0 %v707
      %732 = vmatpush1.msra.mxu0 %v704
      %733 = vmatprep.subr.mxu0 %v693
      %734 = vmatpush1.msra.mxu0 %v692
      %735 = vmatprep.subr.mxu0 %v691
      %736 = vmatpush1.msra.mxu0 %v690
      %737 = vmatprep.subr.mxu0 %v689
      %738 = vmatpush1.msra.mxu0 %v688
      %739 = vmatprep.subr.mxu0 %v687
      %740 = vmatpush1.msra.mxu0 %v686
      %741 = vmatprep.subr.mxu0 0.0
      %742 = vmatpush2.msra.mxu0 0.0
      %743 = vmatprep.subr.mxu0 0.0
      %744 = vmatpush2.msra.mxu0 0.0
      %745 = vmatprep.subr.mxu0 0.0
      %746 = vmatpush2.msra.mxu0 0.0
      %747 = vmatprep.subr.mxu0 0.0
      %748 = vmatpush2.msra.mxu0 0.0
      %749 = vmatprep.subr.mxu0 0.0
      %750 = vmatpush2.msra.mxu0 0.0
      %751 = vmatprep.subr.mxu0 0.0
      %752 = vmatpush2.msra.mxu0 0.0
      %753 = vmatprep.subr.mxu0 0.0
      %754 = vmatpush2.msra.mxu0 0.0
      %755 = vmatprep.subr.mxu0 0.0
      %756 = vmatpush2.msra.mxu0 0.0
      %757 = vmatprep.subr.mxu0 0.0
      %758 = vmatpush2.msra.mxu0 0.0
      %759 = vmatprep.subr.mxu0 0.0
      %760 = vmatpush2.msra.mxu0 0.0
      %761 = vmatprep.subr.mxu0 0.0
      %762 = vmatpush2.msra.mxu0 0.0
      %763 = vmatprep.subr.mxu0 0.0
      %764 = vmatpush2.msra.mxu0 0.0
      %765 = vmatprep.subr.mxu0 0.0
      %766 = vmatpush2.msra.mxu0 0.0
      %767 = vmatprep.subr.mxu0 0.0
      %768 = vmatpush2.msra.mxu0 0.0
      %769 = vmatprep.subr.mxu0 0.0
      %770 = vmatpush2.msra.mxu0 0.0
      %771 = vmatprep.subr.mxu0 0.0
      %772 = vmatpush2.msra.mxu0 0.0
      %773 = vmatprep.mubr.f32.mxu0 0.0
      %774 = vmatmul.mubr.f32.gmra.mxu0 %v701
      %v775 = vpop.f32.mrf.mxu0
      %v776 = vadd.f32 %v697, %v775
      %v777 = vpop.f32.mrf.mxu0
      %v778 = vadd.f32 %v697, %v777
      %779 = vdwg.mxu0
      %v780 = vmax.f32 %v776, 0.0
      %v781 = vmax.f32 %v778, 0.0
      %v783 = vcombine.low %v368, %v368
      %v785 = vsel %vm407, %v780, %v783
      %v786 = vsel %vm407, %v781, %v368
      %788 = vset.pattern.permute.xlu0 0
      %789 = vperm.xlu0 %788, %v367
      %v790 = vpop.permute.xlu0 %789
      %vm792 = vcmask 64512
      %v794 = vsel %vm792, %v366, 0
      %796 = vmatprep.subr.mxu0 0.0
      %797 = vmatpush1.msra.mxu0 0.0
      %798 = vmatprep.subr.mxu0 0.0
      %799 = vmatpush1.msra.mxu0 0.0
      %800 = vmatprep.subr.mxu0 0.0
      %801 = vmatpush1.msra.mxu0 0.0
      %802 = vmatprep.subr.mxu0 0.0
      %803 = vmatpush1.msra.mxu0 0.0
      %804 = vmatprep.subr.mxu0 0.0
      %805 = vmatpush1.msra.mxu0 0.0
      %806 = vmatprep.subr.mxu0 0.0
      %807 = vmatpush1.msra.mxu0 0.0
      %808 = vmatprep.subr.mxu0 0.0
      %809 = vmatpush1.msra.mxu0 0.0
      %810 = vmatprep.subr.mxu0 0.0
      %811 = vmatpush1.msra.mxu0 0.0
      %812 = vmatprep.subr.mxu0 0.0
      %813 = vmatpush1.msra.mxu0 0.0
      %814 = vmatprep.subr.mxu0 0.0
      %815 = vmatpush1.msra.mxu0 0.0
      %816 = vmatprep.subr.mxu0 0.0
      %817 = vmatpush1.msra.mxu0 0.0
      %818 = vmatprep.subr.mxu0 0.0
      %819 = vmatpush1.msra.mxu0 0.0
      %820 = vmatprep.subr.mxu0 0.0
      %821 = vmatpush1.msra.mxu0 0.0
      %822 = vmatprep.subr.mxu0 0.0
      %823 = vmatpush1.msra.mxu0 0.0
      %824 = vmatprep.subr.mxu0 0.0
      %825 = vmatpush1.msra.mxu0 0.0
      %826 = vmatprep.subr.mxu0 %v786
      %827 = vmatpush1.msra.mxu0 %v785
      %828 = vmatprep.subr.mxu0 0.0
      %829 = vmatpush2.msra.mxu0 0.0
      %830 = vmatprep.subr.mxu0 0.0
      %831 = vmatpush2.msra.mxu0 0.0
      %832 = vmatprep.subr.mxu0 0.0
      %833 = vmatpush2.msra.mxu0 0.0
      %834 = vmatprep.subr.mxu0 0.0
      %835 = vmatpush2.msra.mxu0 0.0
      %836 = vmatprep.subr.mxu0 0.0
      %837 = vmatpush2.msra.mxu0 0.0
      %838 = vmatprep.subr.mxu0 0.0
      %839 = vmatpush2.msra.mxu0 0.0
      %840 = vmatprep.subr.mxu0 0.0
      %841 = vmatpush2.msra.mxu0 0.0
      %842 = vmatprep.subr.mxu0 0.0
      %843 = vmatpush2.msra.mxu0 0.0
      %844 = vmatprep.subr.mxu0 0.0
      %845 = vmatpush2.msra.mxu0 0.0
      %846 = vmatprep.subr.mxu0 0.0
      %847 = vmatpush2.msra.mxu0 0.0
      %848 = vmatprep.subr.mxu0 0.0
      %849 = vmatpush2.msra.mxu0 0.0
      %850 = vmatprep.subr.mxu0 0.0
      %851 = vmatpush2.msra.mxu0 0.0
      %852 = vmatprep.subr.mxu0 0.0
      %853 = vmatpush2.msra.mxu0 0.0
      %854 = vmatprep.subr.mxu0 0.0
      %855 = vmatpush2.msra.mxu0 0.0
      %856 = vmatprep.subr.mxu0 0.0
      %857 = vmatpush2.msra.mxu0 0.0
      %858 = vmatprep.subr.mxu0 0.0
      %859 = vmatpush2.msra.mxu0 0.0
      %860 = vmatprep.mubr.f32.mxu0 0.0
      %861 = vmatmul.mubr.f32.gmra.mxu0 %v794
      %v862 = vpop.f32.mrf.mxu0
      %v863 = vadd.f32 %v790, %v862
      %v864 = vpop.f32.mrf.mxu0
      %v865 = vadd.f32 %v790, %v864
      %866 = vdwg.mxu0
      %867 = vst [vmem:[%s359] sm:$0xff] %v863
      %868 = vst [vmem:[%s359 + $0x8] sm:$0xff] %v865
      %p869 = scmp.lt.s32.totalorder %s21, 1
      %s870 = scalar_select %p869, %s21, 1
      %s871 = smul.addr %s870, 2
      %s872 = smul.addr %s871, 8
      %s873 = scalar_lea.vmem %s10, %s872
      // Predicated region
      $region61: #{residual_pallas.1} parent=59 // pred_check
        %p874 = pneg %p254
      $region62: #{residual_pallas.1} parent=59 // pred_check_branch
        %876 = sbr.rel (%p874) target = $region64
      $region63: #{residual_pallas.1} parent=59 // pred_region
        _
      $region64: #{residual_pallas.1} parent=59 // pred_fallthru
        _
    $region60: #{residual_pallas.1} parent=5 // pred_fallthru
      _
    %p877 = scmp.le.s32.totalorder 2, %s16
    // Predicated region
    $region65: #{residual_pallas.1} parent=5 // pred_check
      %p878 = pneg %p877
    $region66: #{residual_pallas.1} parent=5 // pred_check_branch
      %880 = sbr.rel (%p878) target = $region68
    $region67: #{residual_pallas.1} parent=5 // pred_region
      %s881 = ssub.s32 %s16, 2
      // Predicated region
      $region69: #{residual_pallas.1} parent=67 // pred_check
        %p882 = pneg %p260
      $region70: #{residual_pallas.1} parent=67 // pred_check_branch
        %884 = sbr.rel (%p882) target = $region72
      $region71: #{residual_pallas.1} parent=67 // pred_region
        %p885 = scmp.lt.s32.totalorder %s22, 1
        %s886 = scalar_select %p885, %s22, 1
        %s887 = smul.addr %s886, 2
        %s888 = smul.addr %s887, 8
        %s889 = scalar_lea.vmem %s10, %s888
      $region72: #{residual_pallas.1} parent=67 // pred_fallthru
        _
    $region68: #{residual_pallas.1} parent=5 // pred_fallthru
      _
  $region6: #{residual_pallas.1} parent=0 // loop_footer
    %s20 = sadd.s32 1, %s16
  $region7: #{residual_pallas.1} parent=0 // loop_footer_branch
    %15 = sbr.rel target = $region3
  $region8: #{residual_pallas.1} parent=0 // loop_exit
    _

</llo_original>
